<compile_context>
chip_gen: v5e
topology: v5e:2x2
jax: 0.10.0
libtpu: 0.0.40
codegen_flags: <defaults>
</compile_context>

<pallas_src>
import functools

import jax
import jax.numpy as jnp
from jax.experimental import pallas as pl
from jax.experimental.pallas import tpu as pltpu


def _swish_kernel(x_ref, o_ref, *, native_bf16):
    x = x_ref[...]
    if native_bf16 and x.dtype == jnp.bfloat16:
        # Native bf16 path (v6e/v7x): halves vreg pressure / load-store slots.
        o_ref[...] = x * jax.nn.sigmoid(x)
    else:
        xf = x.astype(jnp.float32)
        o_ref[...] = (xf * jax.nn.sigmoid(xf)).astype(o_ref.dtype)


@functools.lru_cache(maxsize=1)
def _chip_config():
    """(block_bytes, vmem_limit_bytes or None, min_grid_steps, native_bf16)."""
    kind = ""
    try:
        kind = jax.devices()[0].device_kind.lower()
    except Exception:  # pragma: no cover - defensive; fall back to safe defaults
        pass
    if "v7" in kind:
        # 3.2 TB/s HBM per TC, 64 MiB physical VMEM (32 MiB scoped default),
        # 2 TensorCores per chip -> large blocks + >=2 grid steps.
        return 8 * 1024 * 1024, 48 << 20, 2, True
    if "v6" in kind:
        # 4 MiB blocks: 4 double-buffered blocks = 16 MiB < 32 MiB scoped default.
        return 4 * 1024 * 1024, None, 1, True
    # v5e / older / unknown: conservative; 2 MiB blocks already hit roofline.
    return 2 * 1024 * 1024, None, 1, False


def _swish_2d(x2d, *, block_bytes, vmem_limit, min_steps, native_bf16):
    rows, width = x2d.shape
    dtype = x2d.dtype
    itemsize = jnp.dtype(dtype).itemsize
    n = rows * width

    # ---- Block rows: target ~block_bytes per buffer, sublane-aligned. ----
    tr = block_bytes // (width * itemsize)
    tr = max(32, (tr // 32) * 32)  # multiple of 32 covers f32/bf16/int8 tiling
    if tr >= rows:
        if min_steps > 1 and rows >= 2 * 32:
            # Keep >= min_steps grid steps so dimension_semantics=("parallel",)
            # can shard across both v7x TensorCores.
            per_step = -(-rows // min_steps)  # ceil
            tr = max(32, (per_step // 32) * 32)
            grid = (pl.cdiv(rows, tr),)
        else:
            # Whole (small) array in one block; block == full array dims is
            # legal even when rows is not a multiple of 8.
            tr = rows
            grid = (1,)
    else:
        # Large array: cdiv grid; Pallas masks the partial trailing block.
        grid = (pl.cdiv(rows, tr),)

    cp_kwargs = dict(dimension_semantics=("parallel",))
    if vmem_limit is not None:
        cp_kwargs["vmem_limit_bytes"] = vmem_limit

    kernel = functools.partial(_swish_kernel, native_bf16=native_bf16)
    return pl.pallas_call(
        kernel,
        out_shape=jax.ShapeDtypeStruct((rows, width), dtype),
        grid_spec=pltpu.PrefetchScalarGridSpec(
            num_scalar_prefetch=0,
            grid=grid,
            in_specs=[pl.BlockSpec((tr, width), lambda i: (i, 0))],
            out_specs=pl.BlockSpec((tr, width), lambda i: (i, 0)),
        ),
        compiler_params=pltpu.CompilerParams(**cp_kwargs),
        cost_estimate=pl.CostEstimate(
            flops=4 * n,
            transcendentals=n,
            bytes_accessed=2 * n * itemsize,
        ),
    )(x2d)


def swish(x: jax.Array, *, block_bytes: int | None = None,
          min_pallas_bytes: int = 256 * 1024) -> jax.Array:
    """Elementwise Swish: x * sigmoid(x). Works for any input shape/dtype."""
    orig_shape = x.shape
    dtype = x.dtype
    n = x.size
    if n == 0:
        return x

    itemsize = jnp.dtype(dtype).itemsize

    # ---- Small-tensor bypass: custom-call + per-step overhead dominates. ----
    if n * itemsize < min_pallas_bytes:
        return x * jax.nn.sigmoid(x)

    default_block, vmem_limit, min_steps, native_bf16 = _chip_config()
    if block_bytes is None:
        block_bytes = default_block

    # ---- Fast path: direct reshape to a wide, lane-dense slab. ----
    width = None
    for w in (1024, 512, 256, 128):
        if n % w == 0:
            width = w
            break

    if width is not None:
        out2d = _swish_2d(
            jnp.reshape(x, (-1, width)),
            block_bytes=block_bytes, vmem_limit=vmem_limit,
            min_steps=min_steps, native_bf16=native_bf16)
        return jnp.reshape(out2d, orig_shape)

    # ---- Ragged fallback: 128-aligned bulk via the kernel, tiny tail in JAX.
    # (No whole-array pad+slice round trips -> no extra HBM passes over bulk
    #  beyond the single concat; tail is < 128 elements.)
    flat = jnp.reshape(x, (-1,))
    bulk_n = (n // 128) * 128
    if bulk_n == 0:
        return jnp.reshape(flat * jax.nn.sigmoid(flat), orig_shape)
    bulk_width = 128
    for w in (1024, 512, 256):
        if bulk_n % w == 0:
            bulk_width = w
            break
    bulk_out = _swish_2d(
        jnp.reshape(flat[:bulk_n], (-1, bulk_width)),
        block_bytes=block_bytes, vmem_limit=vmem_limit,
        min_steps=min_steps, native_bf16=native_bf16)
    tail = flat[bulk_n:]
    tail_out = tail * jax.nn.sigmoid(tail)
    out_flat = jnp.concatenate([jnp.reshape(bulk_out, (-1,)), tail_out])
    return jnp.reshape(out_flat, orig_shape)


def _check(x, *, atol=1e-6, rtol=1e-6, **kw):
    y = swish(x, **kw)
    jax.block_until_ready(y)
    xf = x.astype(jnp.float32)
    y_ref = (xf * jax.nn.sigmoid(xf)).astype(x.dtype)
    assert y.shape == x.shape and y.dtype == x.dtype
    assert jnp.allclose(y.astype(jnp.float32), y_ref.astype(jnp.float32),
                        atol=atol, rtol=rtol), "mismatch vs reference"


if __name__ == "__main__":
    key = jax.random.PRNGKey(0)
    k0, k1, k2, k3, k4 = jax.random.split(key, 5)

    # Main case: NCHW conv activation, batch=2, C=4, 16x16.
    # Small -> exercised via the plain-JAX bypass (strictly faster at this size).
    x = jax.random.normal(k0, (2, 4, 16, 16), dtype=jnp.float32)
    _check(x)

    # Same shape forced through the Pallas kernel (single (2, 1024) block).
    _check(x, min_pallas_bytes=0)

    # Larger slab through the kernel with generation-default block sizing
    # (on v7x this splits into >=2 grid steps for both TensorCores).
    x_big = jax.random.normal(k1, (512, 1024), dtype=jnp.float32)
    _check(x_big)

    # bf16: native bf16 compute on v6e/v7x, f32 compute (bf16 I/O) on v5e.
    x_bf16 = jax.random.normal(k2, (512, 256), dtype=jnp.bfloat16)
    _check(x_bf16, atol=2e-2, rtol=2e-2)

    # Ragged size (4100 elements): 128-aligned bulk via kernel + 4-element tail.
    x_ragged = jax.random.normal(k3, (41, 100), dtype=jnp.float32)
    _check(x_ragged, min_pallas_bytes=0)

    # Multi-block with a partial trailing block: rows=41, width=128, tr=32
    # (small block_bytes forces the cdiv grid / edge-masking path).
    x_multi = jax.random.normal(k4, (41, 128), dtype=jnp.float32)
    _check(x_multi, min_pallas_bytes=0, block_bytes=16 * 1024)

    print("KERNEL_OK")
</pallas_src>

<mosaic_0001>
module attributes {stable_mosaic.version = 11 : i64} {
  func.func @_swish_kernel(%arg0: i32, %arg1: memref<2x1024xf32, #tpu.memory_space<vmem>>, %arg2: memref<2x1024xf32, #tpu.memory_space<vmem>>) attributes {dimension_semantics = [#tpu.dimension_semantics<parallel>], iteration_bounds = array<i64: 1>, scalar_prefetch = 0 : i64, scratch_operands = 0 : i64, tpu.core_type = #tpu.core_type<tc>, window_params = [{transform_indices = @transform_0, window_bounds = array<i64: 2, 1024>}, {transform_indices = @transform_1, window_bounds = array<i64: 2, 1024>}]} {
    %c0 = arith.constant 0 : index
    %c0_0 = arith.constant 0 : index
    %0 = vector.load %arg1[%c0, %c0_0] : memref<2x1024xf32, #tpu.memory_space<vmem>>, vector<2x1024xf32>
    %1 = arith.negf %0 : vector<2x1024xf32>
    %2 = math.exp %1 : vector<2x1024xf32>
    %cst = arith.constant 1.000000e+00 : f32
    %3 = vector.broadcast %cst : f32 to vector<2x1024xf32>
    %4 = arith.addf %3, %2 : vector<2x1024xf32>
    %5 = arith.divf %3, %4 : vector<2x1024xf32>
    %6 = arith.mulf %0, %5 : vector<2x1024xf32>
    %c0_1 = arith.constant 0 : index
    %c0_2 = arith.constant 0 : index
    %7 = vector.load %arg2[%c0_1, %c0_2] : memref<2x1024xf32, #tpu.memory_space<vmem>>, vector<2x1024xf32>
    tpu.vector_store %arg2[%c0_1, %c0_2], %6 {strides = array<i32>} : memref<2x1024xf32, #tpu.memory_space<vmem>>, vector<2x1024xf32>,
    return
  }
  func.func @transform_0(%arg0: i32) -> (i32, i32) {
    %c0_i32 = arith.constant 0 : i32
    %c0_i32_0 = arith.constant 0 : i32
    return %arg0, %c0_i32 : i32, i32
  }
  func.func @transform_1(%arg0: i32) -> (i32, i32) {
    %c0_i32 = arith.constant 0 : i32
    %c0_i32_0 = arith.constant 0 : i32
    return %arg0, %c0_i32 : i32, i32
  }
}

</mosaic_0001>

<llo_original>
// kernel: tpu_custom_call.1
$region0: #{tpu_custom_call.1}
  #allocation0 [shape = 'u32[]', space=smem, size = 0x4, offset = 0x4, fixed_abs, tag = 'smem constant byte address 0x4 - core index']
  #allocation1 [shape = 'u32[72,128]{1,0:T(1,128)}', space=vmem, size = 0x9000, scoped, tag = 'internal scratch']
  %s0 = inlined_call_operand.hbm [shape: f32[2,1024], index: 0, kind: input, shape index: {}]
  %s1 = inlined_call_operand.hbm [shape: f32[2,1024], index: 1, kind: output, shape index: {}]
  %s2 = sld [smem:[#allocation0]]
  $region18: #{tpu_custom_call.1} parent=0
    _
  %s4 = ssub.s32 1, %s2
  %s5 = scalar_select 0, %s4, %s2
  $region1: #{tpu_custom_call.1} parent=0
    #allocation2 [shape = 'u8[8192]{0}', space=vmem, size = 0x2000, scoped, tag = 'input window, operand 0, single buffered']
    #allocation3 [shape = 's32[1]{0}', space=sflag, size = 0x4, scoped, tag = 'scoped memory for tpu_custom_call.1']
    #allocation4 [shape = 's32[1]{0}', space=sflag, size = 0x4, scoped, tag = 'scoped memory for tpu_custom_call.1']
    #allocation5 [shape = 'u8[8192]{0}', space=vmem, size = 0x2000, scoped, tag = 'output window, operand 0, single buffered']
    %6 = vsyncpa [#allocation3], 0
    %7 = vsyncpa [#allocation4], 0
    // Predicated region
    $region2: #{tpu_custom_call.1} parent=1 // pred_check
      _
    $region3: #{tpu_custom_call.1} parent=1 // pred_check_branch
      %9 = sbr.rel (0) target = $region5
    $region4: #{tpu_custom_call.1} parent=1 // pred_region
      %11 = vsyncadd [#allocation3], 0
      %s13 = sshll.u32 %s0, 4
      %s14 = int_to_ptr.hbm [resolvable:$true] %s13
      %s15 = sshll.u32 [#allocation2], 4
      %s16 = int_to_ptr.vmem [resolvable:$true] %s15
      %18 = dma.hbm_to_vmem [thread:$0]  %s14, 256, %s16, [#allocation3]
    $region5: #{tpu_custom_call.1} parent=1 // pred_fallthru
      _
    // Predicated region
    $region6: #{tpu_custom_call.1} parent=1 // pred_check
      _
    $region7: #{tpu_custom_call.1} parent=1 // pred_check_branch
      %20 = sbr.rel (0) target = $region9
    $region8: #{tpu_custom_call.1} parent=1 // pred_region
      %22 = dma.done [#allocation3], 256
    $region9: #{tpu_custom_call.1} parent=1 // pred_fallthru
      _
    %v23 = vld [vmem:[#allocation2] sm:$0xff]
    %v24 = vld [vmem:[#allocation2 + $0x8] sm:$0xff]
    %v25 = vxor.u32 %v23, 2147483648
    %v26 = vxor.u32 %v24, 2147483648
    %v27 = vmul.f32 %v25, 1.442695
    %v28 = vpow.pop %v27
    %v29 = vmul.f32 %v26, 1.442695
    %v30 = vpow.pop %v29
    %v31 = vadd.f32 %v28, 1.0
    %v32 = vadd.f32 %v30, 1.0
    %v33 = vrcp.pop %v31
    %v34 = vmul.f32 %v31, %v33
    %v35 = vsub.f32 1.0, %v34
    %v36 = vmul.f32 %v33, %v35
    %v37 = vadd.f32 %v33, %v36
    %vm38 = vweird.f32 %v31
    %vm39 = vweird.f32 %v33
    %vm40 = vmor %vm38, %vm39
    %v41 = vsel %vm40, %v33, %v37
    %v42 = vand.u32 2147483647, %v31
    %vm43 = vcmp.eq.f32.partialorder %v42, 8.507059e+37
    %v44 = vand.u32 %v31, 2147483648
    %v45 = vor.u32 1.1754944e-38, %v44
    %v46 = vsel %vm43, %v45, %v41
    %v47 = vmul.f32 1.0, %v46
    %v48 = vrcp.pop %v32
    %v49 = vmul.f32 %v32, %v48
    %v50 = vsub.f32 1.0, %v49
    %v51 = vmul.f32 %v48, %v50
    %v52 = vadd.f32 %v48, %v51
    %vm53 = vweird.f32 %v32
    %vm54 = vweird.f32 %v48
    %vm55 = vmor %vm53, %vm54
    %v56 = vsel %vm55, %v48, %v52
    %v57 = vand.u32 2147483647, %v32
    %vm58 = vcmp.eq.f32.partialorder %v57, 8.507059e+37
    %v59 = vand.u32 %v32, 2147483648
    %v60 = vor.u32 1.1754944e-38, %v59
    %v61 = vsel %vm58, %v60, %v56
    %v62 = vmul.f32 1.0, %v61
    %v63 = vmul.f32 %v23, %v47
    %v64 = vmul.f32 %v24, %v62
    %65 = vst [vmem:[#allocation5] sm:$0xff] %v63
    %66 = vst [vmem:[#allocation5 + $0x8] sm:$0xff] %v64
    // Predicated region
    $region10: #{tpu_custom_call.1} parent=1 // pred_check
      _
    $region11: #{tpu_custom_call.1} parent=1 // pred_check_branch
      %68 = sbr.rel (0) target = $region13
    $region12: #{tpu_custom_call.1} parent=1 // pred_region
      %70 = vsyncadd [#allocation4], 0
      %s72 = sshll.u32 [#allocation5], 4
      %s73 = int_to_ptr.vmem [resolvable:$true] %s72
      %s74 = sshll.u32 %s1, 4
      %s75 = int_to_ptr.hbm [resolvable:$true] %s74
      %77 = dma.vmem_to_hbm [thread:$0]  %s73, 256, %s75, [#allocation4]
    $region13: #{tpu_custom_call.1} parent=1 // pred_fallthru
      _
    // Predicated region
    $region14: #{tpu_custom_call.1} parent=1 // pred_check
      _
    $region15: #{tpu_custom_call.1} parent=1 // pred_check_branch
      %79 = sbr.rel (0) target = $region17
    $region16: #{tpu_custom_call.1} parent=1 // pred_region
      %81 = dma.done [#allocation4], 256
    $region17: #{tpu_custom_call.1} parent=1 // pred_fallthru
      _
    %82 = vsyncpa [#allocation3], 1
    %83 = vsyncpa [#allocation4], 1

</llo_original>
